<compile_context>
chip_gen: v7x
topology: tpu7x:2x2x1
jax: 0.10.0
libtpu: 0.0.40
codegen_flags: <defaults>
</compile_context>

<pallas_src>
import functools
import math

import jax
import jax.numpy as jnp
from jax.experimental import pallas as pl
from jax.experimental.pallas import tpu as pltpu

EPS = 1e-4
LANE = 128

_MAX_TILE_ROWS = 4096          # 2 MiB/level (f32) per grid step
_MIN_TILE_ROWS_FOR_BW = 1024   # >= 512 KiB/level keeps step overhead amortized
_TARGET_GRID_STEPS = 8         # let v7x's 2 TensorCores shard the parallel axis
_VMEM_LIMIT_BYTES = 32 << 20   # safe scoped limit on v5e/v6e/v7x


def _fused_norm_kernel(w_ref, p_ref, o_ref, *, eps):
    # w_ref: SMEM (S,) float32 raw weights
    # p_ref: VMEM (S, TR, 128) tile of stacked inputs
    # o_ref: VMEM (TR, 128) output tile
    s = p_ref.shape[0]

    # Scalar path: relu + normalization of the S weights.  A handful of sreg
    # ops per grid step -- negligible next to the tile DMA, and recomputing
    # avoids any cross-core init ordering issues with the "parallel" grid.
    ws = []
    wsum = jnp.float32(0.0)
    for i in range(s):
        wi = jnp.maximum(w_ref[i], jnp.float32(0.0))
        ws.append(wi)
        wsum = wsum + wi
    inv = 1.0 / (wsum + jnp.float32(eps))

    # Hot path: weighted sum over the level axis on the VPU (f32 accumulate).
    acc = (ws[0] * inv) * p_ref[0]
    for i in range(1, s):
        acc = acc + (ws[i] * inv) * p_ref[i]
    o_ref[...] = acc.astype(o_ref.dtype)


def _default_vmem_budget_bytes():
    """Budget for live pipelined buffers; fits every TPU generation."""
    try:
        cap = pltpu.get_tpu_info().vmem_capacity_bytes
    except Exception:
        cap = 64 << 20  # assume the smallest per-core VMEM (v7x) if query fails
    return max(8 << 20, min(cap // 2 - (8 << 20), 24 << 20))


def _pick_tile_rows(rows, s, itemsize, vmem_budget_bytes):
    # Live VMEM per tile row: double-buffered (S inputs + 1 output) blocks plus
    # ~2 f32 rows of elementwise temporaries (accumulator etc.).
    per_row = 2 * (s + 1) * LANE * itemsize + 2 * LANE * 4
    tr = min(vmem_budget_bytes // per_row, _MAX_TILE_ROWS)
    tr = max(32, (tr // 32) * 32)  # multiple of 32: legal for f32/bf16/int8 sublanes
    if tr >= rows:
        return rows                # single full block (always a legal block shape)
    # Prefer >= ~8 grid steps (v7x megacore sharding) as long as the tile stays
    # >= 1024 rows so DMA size still dominates the per-step overhead.
    if rows >= _TARGET_GRID_STEPS * _MIN_TILE_ROWS_FOR_BW:
        per_step = -(-rows // _TARGET_GRID_STEPS)
        per_step = max(_MIN_TILE_ROWS_FOR_BW, ((per_step + 31) // 32) * 32)
        tr = min(tr, per_step)
    return tr


def fused_normalization(w, p, *, eps=EPS, tile_rows=None, vmem_budget_bytes=None):
    """w: (S,) float32; p: (S, *dims) -> (*dims).  Matches FusedNormalization."""
    s = p.shape[0]
    out_dims = p.shape[1:]
    n = math.prod(out_dims)
    dtype = p.dtype
    itemsize = jnp.dtype(dtype).itemsize

    rows = -(-n // LANE)
    n_pad = rows * LANE

    p_flat = p.reshape(s, n)
    if n_pad != n:
        # Ragged lane tail: one extra copy, only taken when numel % 128 != 0.
        p_flat = jnp.pad(p_flat, ((0, 0), (0, n_pad - n)))
    p_slab = p_flat.reshape(s, rows, LANE)

    if vmem_budget_bytes is None:
        vmem_budget_bytes = _default_vmem_budget_bytes()
    if tile_rows is None:
        tr = _pick_tile_rows(rows, s, itemsize, vmem_budget_bytes)
    else:
        tr = min(int(tile_rows), rows)
        if tr < rows:
            tr = max(8, (tr // 8) * 8)  # keep the (8, 128) block constraint

    grid = (-(-rows // tr),)  # ragged last block handled by Pallas masking

    out_slab = pl.pallas_call(
        functools.partial(_fused_norm_kernel, eps=eps),
        out_shape=jax.ShapeDtypeStruct((rows, LANE), dtype),
        grid_spec=pltpu.PrefetchScalarGridSpec(
            num_scalar_prefetch=0,
            grid=grid,
            in_specs=[
                pl.BlockSpec(memory_space=pltpu.MemorySpace.SMEM),
                pl.BlockSpec((s, tr, LANE), lambda i: (0, i, 0)),
            ],
            out_specs=pl.BlockSpec((tr, LANE), lambda i: (i, 0)),
        ),
        compiler_params=pltpu.CompilerParams(
            dimension_semantics=("parallel",),
            vmem_limit_bytes=_VMEM_LIMIT_BYTES,
        ),
    )(w.astype(jnp.float32), p_slab)

    if n_pad != n:
        return out_slab.reshape(n_pad)[:n].reshape(out_dims)
    return out_slab.reshape(out_dims)


def _reference(w, p, eps=EPS):
    w = jnp.maximum(w, 0.0)
    w = w / (jnp.sum(w) + eps)
    return jnp.tensordot(w, p, axes=([0], [0]))


if __name__ == "__main__":
    key = jax.random.PRNGKey(0)
    k_w, k_p, k_w2, k_p2 = jax.random.split(key, 4)

    # Case 1: NCHW levels whose numel is a multiple of 128 -> no padding,
    # single full block, auto-sized tile.
    size = 3
    B, C, H, W = 2, 4, 16, 16
    w = jax.random.uniform(k_w, (size,), dtype=jnp.float32)   # torch.rand(size)
    p = jax.random.normal(k_p, (size, B, C, H, W), dtype=jnp.float32)
    out = jax.block_until_ready(fused_normalization(w, p))
    ref = _reference(w, p)
    assert out.shape == (B, C, H, W)
    assert jnp.allclose(out, ref, atol=1e-5, rtol=1e-5)

    # Case 2: ragged lane tail (numel % 128 != 0) and S=4.
    w2 = jax.random.uniform(k_w2, (4,), dtype=jnp.float32)
    p2 = jax.random.normal(k_p2, (4, 1, 3, 10, 10), dtype=jnp.float32)
    out2 = jax.block_until_ready(fused_normalization(w2, p2))
    assert jnp.allclose(out2, _reference(w2, p2), atol=1e-5, rtol=1e-5)

    # Case 3: multi-step grid with a ragged last block (rows=18, tile_rows=8).
    p3 = jax.random.normal(k_p, (size, 1, 9, 16, 16), dtype=jnp.float32)
    out3 = jax.block_until_ready(fused_normalization(w, p3, tile_rows=8))
    assert jnp.allclose(out3, _reference(w, p3), atol=1e-5, rtol=1e-5)

    print("KERNEL_OK")
</pallas_src>

<mosaic_0001>
module attributes {stable_mosaic.version = 11 : i64} {
  func.func @_fused_norm_kernel(%arg0: i32, %arg1: memref<3xf32, #tpu.memory_space<smem>>, %arg2: memref<3x16x128xf32, #tpu.memory_space<vmem>>, %arg3: memref<16x128xf32, #tpu.memory_space<vmem>>) attributes {dimension_semantics = [#tpu.dimension_semantics<parallel>], iteration_bounds = array<i64: 1>, scalar_prefetch = 0 : i64, scratch_operands = 0 : i64, tpu.core_type = #tpu.core_type<tc>, window_params = [{transform_indices = @transform_0, window_bounds = array<i64: 3>}, {transform_indices = @transform_1, window_bounds = array<i64: 3, 16, 128>}, {transform_indices = @transform_2, window_bounds = array<i64: 16, 128>}]} {
    %c0 = arith.constant 0 : index
    %0 = memref.load %arg1[%c0] : memref<3xf32, #tpu.memory_space<smem>>
    %cst = arith.constant 0.000000e+00 : f32
    %1 = arith.maximumf %0, %cst : f32
    %cst_0 = arith.constant 0.000000e+00 : f32
    %2 = arith.addf %cst_0, %1 : f32
    %c1 = arith.constant 1 : index
    %3 = memref.load %arg1[%c1] : memref<3xf32, #tpu.memory_space<smem>>
    %cst_1 = arith.constant 0.000000e+00 : f32
    %4 = arith.maximumf %3, %cst_1 : f32
    %5 = arith.addf %2, %4 : f32
    %c2 = arith.constant 2 : index
    %6 = memref.load %arg1[%c2] : memref<3xf32, #tpu.memory_space<smem>>
    %cst_2 = arith.constant 0.000000e+00 : f32
    %7 = arith.maximumf %6, %cst_2 : f32
    %8 = arith.addf %5, %7 : f32
    %cst_3 = arith.constant 9.99999974E-5 : f32
    %9 = arith.addf %8, %cst_3 : f32
    %cst_4 = arith.constant 1.000000e+00 : f32
    %10 = arith.divf %cst_4, %9 : f32
    %11 = arith.mulf %1, %10 : f32
    %c0_5 = arith.constant 0 : index
    %c0_6 = arith.constant 0 : index
    %c0_7 = arith.constant 0 : index
    %12 = vector.load %arg2[%c0_5, %c0_6, %c0_7] : memref<3x16x128xf32, #tpu.memory_space<vmem>>, vector<1x16x128xf32>
    %13 = vector.shape_cast %12 : vector<1x16x128xf32> to vector<16x128xf32>
    %14 = vector.broadcast %11 : f32 to vector<16x128xf32>
    %15 = arith.mulf %14, %13 : vector<16x128xf32>
    %16 = arith.mulf %4, %10 : f32
    %c1_8 = arith.constant 1 : index
    %c0_9 = arith.constant 0 : index
    %c0_10 = arith.constant 0 : index
    %17 = vector.load %arg2[%c1_8, %c0_9, %c0_10] : memref<3x16x128xf32, #tpu.memory_space<vmem>>, vector<1x16x128xf32>
    %18 = vector.shape_cast %17 : vector<1x16x128xf32> to vector<16x128xf32>
    %19 = vector.broadcast %16 : f32 to vector<16x128xf32>
    %20 = arith.mulf %19, %18 : vector<16x128xf32>
    %21 = arith.addf %15, %20 : vector<16x128xf32>
    %22 = arith.mulf %7, %10 : f32
    %c2_11 = arith.constant 2 : index
    %c0_12 = arith.constant 0 : index
    %c0_13 = arith.constant 0 : index
    %23 = vector.load %arg2[%c2_11, %c0_12, %c0_13] : memref<3x16x128xf32, #tpu.memory_space<vmem>>, vector<1x16x128xf32>
    %24 = vector.shape_cast %23 : vector<1x16x128xf32> to vector<16x128xf32>
    %25 = vector.broadcast %22 : f32 to vector<16x128xf32>
    %26 = arith.mulf %25, %24 : vector<16x128xf32>
    %27 = arith.addf %21, %26 : vector<16x128xf32>
    %c0_14 = arith.constant 0 : index
    %c0_15 = arith.constant 0 : index
    %28 = vector.load %arg3[%c0_14, %c0_15] : memref<16x128xf32, #tpu.memory_space<vmem>>, vector<16x128xf32>
    tpu.vector_store %arg3[%c0_14, %c0_15], %27 {strides = array<i32>} : memref<16x128xf32, #tpu.memory_space<vmem>>, vector<16x128xf32>,
    return
  }
  func.func @transform_0(%arg0: i32) -> i32 {
    %c0_i32 = arith.constant 0 : i32
    %c0_i32_0 = arith.constant 0 : i32
    return %c0_i32 : i32
  }
  func.func @transform_1(%arg0: i32) -> (i32, i32, i32) {
    %c0_i32 = arith.constant 0 : i32
    %c0_i32_0 = arith.constant 0 : i32
    %c0_i32_1 = arith.constant 0 : i32
    return %c0_i32, %arg0, %c0_i32_0 : i32, i32, i32
  }
  func.func @transform_2(%arg0: i32) -> (i32, i32) {
    %c0_i32 = arith.constant 0 : i32
    %c0_i32_0 = arith.constant 0 : i32
    return %arg0, %c0_i32 : i32, i32
  }
}

</mosaic_0001>

<llo_original>
// kernel: tpu_custom_call.1
$region0: #{tpu_custom_call.1}
  #allocation0 [shape = 'u32[]', space=smem, size = 0x4, offset = 0x4, fixed_abs, tag = 'smem constant byte address 0x4 - core index']
  #allocation1 [shape = 'u32[144,128]{1,0:T(1,128)}', space=vmem, size = 0x12000, scoped, tag = 'internal scratch']
  %s0 = inlined_call_operand.hbm [shape: f32[3], index: 0, kind: input, shape index: {}]
  %s1 = inlined_call_operand.hbm [shape: f32[3,16,128], index: 1, kind: input, shape index: {}]
  %s2 = inlined_call_operand.hbm [shape: f32[16,128], index: 2, kind: output, shape index: {}]
  %s3 = sld [smem:[#allocation0]]
  $region26: #{tpu_custom_call.1} parent=0
    _
  %s5 = ssub.s32 1, %s3
  %s6 = scalar_select 0, %s5, %s3
  $region1: #{tpu_custom_call.1} parent=0
    #allocation2 [shape = 'u8[512]{0}', space=smem, size = 0x200, scoped, tag = 'input window, operand 0, single buffered']
    #allocation3 [shape = 's32[1]{0}', space=sflag, size = 0x4, scoped, tag = 'scoped memory for tpu_custom_call.1']
    #allocation4 [shape = 's32[1]{0}', space=sflag, size = 0x4, scoped, tag = 'scoped memory for tpu_custom_call.1']
    #allocation5 [shape = 's32[1]{0}', space=sflag, size = 0x4, scoped, tag = 'scoped memory for tpu_custom_call.1']
    #allocation6 [shape = 'u8[24576]{0}', space=vmem, size = 0x6000, scoped, tag = 'input window, operand 1, single buffered']
    #allocation7 [shape = 'u8[8192]{0}', space=vmem, size = 0x2000, scoped, tag = 'output window, operand 0, single buffered']
    %7 = vsyncpa [#allocation5], 0
    %8 = vsyncpa [#allocation3], 0
    %9 = vsyncpa [#allocation4], 0
    // Predicated region
    $region2: #{tpu_custom_call.1} parent=1 // pred_check
      _
    $region3: #{tpu_custom_call.1} parent=1 // pred_check_branch
      %11 = sbr.rel (0) target = $region5
    $region4: #{tpu_custom_call.1} parent=1 // pred_region
      %s13 = ssub.s32 16, 16
      %14 = vsyncadd [#allocation5], %s13
      %17 = dma.hbm_to_smem %s0, 16, [#allocation2], [#allocation5]
    $region5: #{tpu_custom_call.1} parent=1 // pred_fallthru
      _
    // Predicated region
    $region6: #{tpu_custom_call.1} parent=1 // pred_check
      _
    $region7: #{tpu_custom_call.1} parent=1 // pred_check_branch
      %19 = sbr.rel (0) target = $region9
    $region8: #{tpu_custom_call.1} parent=1 // pred_region
      %s21 = ssub.s32 768, 768
      %22 = vsyncadd [#allocation3], %s21
      %s23 = sshll.u32 [#allocation6], 4
      %s24 = int_to_ptr.vmem [resolvable:$true] %s23
      %29 = dma.hbm_to_vmem [thread:$0]  %s1, 768, %s24, [#allocation3], 128, 128, 8
    $region9: #{tpu_custom_call.1} parent=1 // pred_fallthru
      _
    // Predicated region
    $region10: #{tpu_custom_call.1} parent=1 // pred_check
      _
    $region11: #{tpu_custom_call.1} parent=1 // pred_check_branch
      %31 = sbr.rel (0) target = $region13
    $region12: #{tpu_custom_call.1} parent=1 // pred_region
      %32 = dma.done [#allocation5], 16
    $region13: #{tpu_custom_call.1} parent=1 // pred_fallthru
      _
    // Predicated region
    $region14: #{tpu_custom_call.1} parent=1 // pred_check
      _
    $region15: #{tpu_custom_call.1} parent=1 // pred_check_branch
      %34 = sbr.rel (0) target = $region17
    $region16: #{tpu_custom_call.1} parent=1 // pred_region
      %35 = dma.done [#allocation3], 768
    $region17: #{tpu_custom_call.1} parent=1 // pred_fallthru
      _
    %36 = sfence
    %s37 = sld [smem:[#allocation2]]
    %s38 = smax.f32 %s37, 0.0
    %s39 = sadd.f32 %s38, 0.0
    %s40 = sld [smem:[#allocation2 + $0x1]]
    %s41 = smax.f32 %s40, 0.0
    %s42 = sadd.f32 %s39, %s41
    %s43 = sld [smem:[#allocation2 + $0x2]]
    %s44 = smax.f32 %s43, 0.0
    %s45 = sadd.f32 %s42, %s44
    %s46 = sadd.f32 %s45, 0.0001
    %v47 = vstv %s46
    %v48 = vrcp.pop %v47
    %s49 = vtos %v48
    %s50 = smul.f32 %s38, %s49
    %v51 = vld [vmem:[#allocation6] sm:$0xff]
    %v52 = vld [vmem:[#allocation6 + $0x8] sm:$0xff]
    %v53 = vstv %s50
    %v54 = vmul.f32 %v53, %v51
    %v55 = vmul.f32 %v53, %v52
    %s56 = smul.f32 %s41, %s49
    %s57 = scalar_lea.vmem [#allocation6], 16
    %v58 = vld [vmem:[%s57] sm:$0xff]
    %v59 = vld [vmem:[%s57 + $0x8] sm:$0xff]
    %v60 = vstv %s56
    %v61 = vmul.f32 %v60, %v58
    %v62 = vmul.f32 %v60, %v59
    %v63 = vadd.f32 %v54, %v61
    %v64 = vadd.f32 %v55, %v62
    %s65 = smul.f32 %s44, %s49
    %s66 = scalar_lea.vmem [#allocation6], 32
    %v67 = vld [vmem:[%s66] sm:$0xff]
    %v68 = vld [vmem:[%s66 + $0x8] sm:$0xff]
    %v69 = vstv %s65
    %v70 = vmul.f32 %v69, %v67
    %v71 = vmul.f32 %v69, %v68
    %v72 = vadd.f32 %v63, %v70
    %v73 = vadd.f32 %v64, %v71
    %74 = vst [vmem:[#allocation7] sm:$0xff] %v72
    %75 = vst [vmem:[#allocation7 + $0x8] sm:$0xff] %v73
    // Predicated region
    $region18: #{tpu_custom_call.1} parent=1 // pred_check
      _
    $region19: #{tpu_custom_call.1} parent=1 // pred_check_branch
      %77 = sbr.rel (0) target = $region21
    $region20: #{tpu_custom_call.1} parent=1 // pred_region
      %s79 = ssub.s32 256, 256
      %80 = vsyncadd [#allocation4], %s79
      %s81 = sshll.u32 [#allocation7], 4
      %s82 = int_to_ptr.vmem [resolvable:$true] %s81
      %87 = dma.vmem_to_hbm [thread:$0]  %s82, 256, %s2, [#allocation4], 128, 128, 8
    $region21: #{tpu_custom_call.1} parent=1 // pred_fallthru
      _
    // Predicated region
    $region22: #{tpu_custom_call.1} parent=1 // pred_check
      _
    $region23: #{tpu_custom_call.1} parent=1 // pred_check_branch
      %89 = sbr.rel (0) target = $region25
    $region24: #{tpu_custom_call.1} parent=1 // pred_region
      %90 = dma.done [#allocation4], 256
    $region25: #{tpu_custom_call.1} parent=1 // pred_fallthru
      _
    %91 = vsyncpa [#allocation3], 1
    %92 = vsyncpa [#allocation4], 1
    %93 = vsyncpa [#allocation5], 1

</llo_original>
